<compile_context>
chip_gen: v5e
topology: v5e:2x2
jax: 0.10.0
libtpu: 0.0.40
codegen_flags: <defaults>
</compile_context>

<pallas_src>
import functools
import math

import jax
import jax.numpy as jnp
from jax.experimental import pallas as pl
from jax.experimental.pallas import tpu as pltpu


def _round_up(v, m):
    return (v + m - 1) // m * m


# ---------------------------------------------------------------------------
# Fused Pallas kernel: all GraphConvolution layers + ReLU + log_softmax
# ---------------------------------------------------------------------------
def _gcn_fused_kernel(x_ref, adj_ref, *refs, n_hidden, has_classifier, nclass):
    n_layers = n_hidden + (1 if has_classifier else 0)
    w_refs = refs[0:2 * n_layers:2]
    b_refs = refs[1:2 * n_layers:2]
    out_refs = refs[2 * n_layers:]
    if has_classifier:
        logp_ref, feat_ref = out_refs
    else:
        (feat_ref,) = out_refs

    compute_dtype = x_ref.dtype
    adj = adj_ref[...]                        # (N_pad, N_pad), VMEM resident
    act = x_ref[...]                          # (N_pad, nfeat_pad)

    hidden_f32 = None
    for l in range(n_hidden):
        # support = x @ W_l   (MXU, f32 accumulation)
        support = jnp.dot(act, w_refs[l][...],
                          preferred_element_type=jnp.float32)
        # out = adj @ support
        out = jnp.dot(adj, support.astype(compute_dtype),
                      preferred_element_type=jnp.float32)
        # bias + ReLU epilogue in f32 (VPU); zero-padded lanes stay exactly 0.
        hidden_f32 = jnp.maximum(out + b_refs[l][...], 0.0)
        # F.dropout(training=False) is the identity.
        # TODO(synk): training-mode dropout via pltpu.prng_random_bits mask.
        act = hidden_f32.astype(compute_dtype)

    if hidden_f32 is None:
        # n_hidden == 0: the "hidden features" are just the (padded) input.
        feat_ref[...] = act.astype(feat_ref.dtype)
    else:
        feat_ref[...] = hidden_f32.astype(feat_ref.dtype)

    if has_classifier:
        # Narrow classifier path: one 128-lane logits block.
        support = jnp.dot(act, w_refs[n_hidden][...],
                          preferred_element_type=jnp.float32)
        logits = jnp.dot(adj, support.astype(compute_dtype),
                         preferred_element_type=jnp.float32)
        logits = logits + b_refs[n_hidden][...]
        lane = jax.lax.broadcasted_iota(jnp.int32, logits.shape, 1)
        valid = lane < nclass
        masked = jnp.where(valid, logits, jnp.float32(-1e30))
        m = jnp.max(masked, axis=1, keepdims=True)
        s = masked - m
        lse = jnp.log(jnp.sum(jnp.where(valid, jnp.exp(s), 0.0),
                              axis=1, keepdims=True))
        logp_ref[...] = jnp.where(valid, s - lse, 0.0).astype(logp_ref.dtype)


# ---------------------------------------------------------------------------
# One-time preparation of static operands (weights, biases, adjacency)
# ---------------------------------------------------------------------------
def prepare_gcn(params, adj, nclass, compute_dtype=jnp.bfloat16):
    L = len(params)
    has_classifier = nclass > 1
    n_hidden = L - 1 if has_classifier else L

    N = adj.shape[0]
    # bf16 packs 16 rows per sublane tile; use 128 once the graph is big
    # enough that the M dim of both matmuls should fill whole MXU tiles.
    n_mult = 128 if N >= 512 else 16
    N_pad = _round_up(N, n_mult)

    adj_pad = jnp.zeros((N_pad, N_pad), compute_dtype)
    adj_pad = adj_pad.at[:N, :N].set(adj.astype(compute_dtype))

    wb = []
    for (w, b) in params:
        fin, fout = w.shape
        fin_p, fout_p = _round_up(fin, 128), _round_up(fout, 128)
        w_p = jnp.zeros((fin_p, fout_p), compute_dtype)
        w_p = w_p.at[:fin, :fout].set(w.astype(compute_dtype))
        b_p = jnp.zeros((1, fout_p), jnp.float32)
        b_p = b_p.at[0, :fout].set(b.astype(jnp.float32))
        wb.append((w_p, b_p))

    nfeat = params[0][0].shape[0]
    nfeat_pad = wb[0][0].shape[0]
    feat_dim = params[n_hidden - 1][0].shape[1] if n_hidden > 0 else nfeat
    feat_pad = wb[n_hidden - 1][0].shape[1] if n_hidden > 0 else nfeat_pad
    cls_pad = _round_up(nclass, 128) if has_classifier else 0

    return dict(adj_pad=adj_pad, wb=wb, N=N, N_pad=N_pad,
                nfeat=nfeat, nfeat_pad=nfeat_pad,
                feat_dim=feat_dim, feat_pad=feat_pad,
                nclass=nclass, cls_pad=cls_pad,
                n_hidden=n_hidden, has_classifier=has_classifier,
                compute_dtype=compute_dtype)


# ---------------------------------------------------------------------------
# Per-call wrapper: pad x, run one fused pallas_call, slice padded outputs
# ---------------------------------------------------------------------------
def gcn_forward(prepared, x, dropout_p=0.0):
    del dropout_p  # inference mode -> dropout is the identity
    p = prepared
    N, N_pad = p["N"], p["N_pad"]
    nfeat, nfeat_pad = p["nfeat"], p["nfeat_pad"]
    n_hidden = p["n_hidden"]
    has_classifier = p["has_classifier"]
    nclass, cls_pad = p["nclass"], p["cls_pad"]
    wb = p["wb"]
    cdt = p["compute_dtype"]

    x_pad = jnp.zeros((N_pad, nfeat_pad), cdt)
    x_pad = x_pad.at[:N, :nfeat].set(x.astype(cdt))

    operands = [x_pad, p["adj_pad"]]
    for (w_p, b_p) in wb:
        operands += [w_p, b_p]

    # Whole-array, single-buffered VMEM residency (no grid -> no pipelining,
    # no pointless double buffering of adj / x / weights / outputs).
    vmem_spec = pl.BlockSpec(memory_space=pltpu.MemorySpace.VMEM)

    out_shapes = []
    if has_classifier:
        out_shapes.append(jax.ShapeDtypeStruct((N_pad, cls_pad), jnp.float32))
    out_shapes.append(jax.ShapeDtypeStruct((N_pad, p["feat_pad"]), jnp.float32))
    out_shapes = tuple(out_shapes)

    # --- advisory cost estimate from the real padded per-layer dims ---
    flops = 0
    for (w_p, _) in wb:
        fin_p, fout_p = w_p.shape
        flops += 2 * N_pad * fin_p * fout_p        # x @ W
        flops += 2 * N_pad * N_pad * fout_p        # adj @ support
    transcendentals = N_pad * cls_pad if has_classifier else 0
    in_bytes = sum(int(op.size) * op.dtype.itemsize for op in operands)
    out_bytes = sum(int(math.prod(s.shape)) * 4 for s in out_shapes)
    cost = pl.CostEstimate(flops=int(flops),
                           transcendentals=int(transcendentals),
                           bytes_accessed=int(in_bytes + out_bytes))

    # --- VMEM budget: operands + outputs + f32 intermediates (single copy) ---
    max_fout_p = max(w_p.shape[1] for (w_p, _) in wb)
    interm_bytes = 3 * N_pad * max_fout_p * 4
    footprint = in_bytes + out_bytes + interm_bytes
    vmem_limit = int(min(max(2 * footprint, 32 << 20), 110 << 20))

    kernel = functools.partial(_gcn_fused_kernel,
                               n_hidden=n_hidden,
                               has_classifier=has_classifier,
                               nclass=nclass)

    results = pl.pallas_call(
        kernel,
        out_shape=out_shapes,
        in_specs=[vmem_spec] * len(operands),
        out_specs=tuple([vmem_spec] * len(out_shapes)),
        compiler_params=pltpu.CompilerParams(vmem_limit_bytes=vmem_limit),
        cost_estimate=cost,
    )(*operands)

    if has_classifier:
        logp_pad, feat_pad = results
        return logp_pad[:N, :nclass], feat_pad[:N, :p["feat_dim"]]
    (feat_pad,) = results
    return None, feat_pad[:N, :p["feat_dim"]]


# ---------------------------------------------------------------------------
# GCN module parameter construction (Kipf-style uniform init)
# ---------------------------------------------------------------------------
def init_gcn_params(key, nfeat, nhid, nclass):
    dims = [nfeat] + list(nhid)
    if nclass > 1:
        dims = dims + [nclass]
    params = []
    for fin, fout in zip(dims[:-1], dims[1:]):
        key, kw, kb = jax.random.split(key, 3)
        stdv = 1.0 / jnp.sqrt(jnp.float32(fout))
        w = jax.random.uniform(kw, (fin, fout), jnp.float32, -stdv, stdv)
        b = jax.random.uniform(kb, (fout,), jnp.float32, -stdv, stdv)
        params.append((w, b))
    return params


# ---------------------------------------------------------------------------
# Pure-JAX reference (f32) for validation
# ---------------------------------------------------------------------------
def gcn_reference(params, x, adj, nclass):
    L = len(params)
    has_classifier = nclass > 1
    n_hidden = L - 1 if has_classifier else L
    h = x
    for l in range(n_hidden):
        w, b = params[l]
        h = jnp.maximum(adj @ (h @ w) + b, 0.0)
    if has_classifier:
        w, b = params[-1]
        logits = adj @ (h @ w) + b
        return jax.nn.log_softmax(logits, axis=1), h
    return None, h


# ---------------------------------------------------------------------------
if __name__ == "__main__":
    nfeat, nhid, nclass, dropout = 16, [32, 16], 4, 0.5
    N = 32  # number of graph nodes

    key = jax.random.PRNGKey(0)
    k_params, k_x, k_adj = jax.random.split(key, 3)

    params = init_gcn_params(k_params, nfeat, nhid, nclass)

    x = jax.random.normal(k_x, (N, nfeat), jnp.float32)

    # symmetric normalized adjacency with self-loops: D^-1/2 (A+I) D^-1/2
    a = (jax.random.uniform(k_adj, (N, N)) < 0.2).astype(jnp.float32)
    a = jnp.maximum(a, a.T)
    a = a + jnp.eye(N, dtype=jnp.float32)
    deg = jnp.sum(a, axis=1)
    dinv = 1.0 / jnp.sqrt(deg)
    adj = a * dinv[:, None] * dinv[None, :]

    # One-time static-operand preparation, then the per-call forward.
    prepared = prepare_gcn(params, adj, nclass)
    logp, feats = gcn_forward(prepared, x, dropout)
    jax.block_until_ready((logp, feats))

    assert logp.shape == (N, nclass)
    assert feats.shape == (N, nhid[-1])
    # log_softmax rows should sum (in prob space) to ~1
    assert jnp.allclose(jnp.sum(jnp.exp(logp), axis=1), 1.0, atol=1e-3)
    # hidden features must be non-negative (ReLU applied)
    assert bool(jnp.all(feats >= 0.0))

    # loose numeric check vs. the f32 reference (kernel uses bf16 MXU inputs)
    logp_ref, feats_ref = gcn_reference(params, x, adj, nclass)
    assert float(jnp.max(jnp.abs(logp - logp_ref))) < 0.35
    assert float(jnp.max(jnp.abs(feats - feats_ref))) < 0.35

    print("KERNEL_OK")
</pallas_src>

<mosaic_0001>
module attributes {stable_mosaic.version = 11 : i64} {
  func.func @_gcn_fused_kernel(%arg0: memref<32x128xbf16, #tpu.memory_space<vmem>>, %arg1: memref<32x32xbf16, #tpu.memory_space<vmem>>, %arg2: memref<128x128xbf16, #tpu.memory_space<vmem>>, %arg3: memref<1x128xf32, #tpu.memory_space<vmem>>, %arg4: memref<128x128xbf16, #tpu.memory_space<vmem>>, %arg5: memref<1x128xf32, #tpu.memory_space<vmem>>, %arg6: memref<128x128xbf16, #tpu.memory_space<vmem>>, %arg7: memref<1x128xf32, #tpu.memory_space<vmem>>, %arg8: memref<32x128xf32, #tpu.memory_space<vmem>>, %arg9: memref<32x128xf32, #tpu.memory_space<vmem>>) attributes {dimension_semantics = [], scalar_prefetch = 0 : i64, scratch_operands = 0 : i64, tpu.core_type = #tpu.core_type<tc>} {
    %c0 = arith.constant 0 : index
    %c0_0 = arith.constant 0 : index
    %0 = vector.load %arg1[%c0, %c0_0] : memref<32x32xbf16, #tpu.memory_space<vmem>>, vector<32x32xbf16>
    %c0_1 = arith.constant 0 : index
    %c0_2 = arith.constant 0 : index
    %1 = vector.load %arg0[%c0_1, %c0_2] : memref<32x128xbf16, #tpu.memory_space<vmem>>, vector<32x128xbf16>
    %c0_3 = arith.constant 0 : index
    %c0_4 = arith.constant 0 : index
    %2 = vector.load %arg2[%c0_3, %c0_4] : memref<128x128xbf16, #tpu.memory_space<vmem>>, vector<128x128xbf16>
    %cst = arith.constant dense<0.000000e+00> : vector<32x128xf32>
    %3 = tpu.matmul %1, %2, %cst {dimension_numbers = #tpu.dot_dimension_numbers<[1], [0], [0], [1], [0, 0, 1, 1], [], []>} : vector<32x128xbf16>, vector<128x128xbf16>, vector<32x128xf32> -> vector<32x128xf32>
    %4 = arith.truncf %3 : vector<32x128xf32> to vector<32x128xbf16>
    %cst_5 = arith.constant dense<0.000000e+00> : vector<32x128xf32>
    %5 = tpu.matmul %0, %4, %cst_5 {dimension_numbers = #tpu.dot_dimension_numbers<[1], [0], [0], [1], [0, 0, 1, 1], [], []>} : vector<32x32xbf16>, vector<32x128xbf16>, vector<32x128xf32> -> vector<32x128xf32>
    %c0_6 = arith.constant 0 : index
    %c0_7 = arith.constant 0 : index
    %6 = vector.load %arg3[%c0_6, %c0_7] : memref<1x128xf32, #tpu.memory_space<vmem>>, vector<1x128xf32>
    %7 = vector.broadcast %6 : vector<1x128xf32> to vector<32x128xf32>
    %8 = arith.addf %5, %7 : vector<32x128xf32>
    %cst_8 = arith.constant 0.000000e+00 : f32
    %9 = vector.broadcast %cst_8 : f32 to vector<32x128xf32>
    %10 = arith.maximumf %8, %9 : vector<32x128xf32>
    %11 = arith.truncf %10 : vector<32x128xf32> to vector<32x128xbf16>
    %c0_9 = arith.constant 0 : index
    %c0_10 = arith.constant 0 : index
    %12 = vector.load %arg4[%c0_9, %c0_10] : memref<128x128xbf16, #tpu.memory_space<vmem>>, vector<128x128xbf16>
    %cst_11 = arith.constant dense<0.000000e+00> : vector<32x128xf32>
    %13 = tpu.matmul %11, %12, %cst_11 {dimension_numbers = #tpu.dot_dimension_numbers<[1], [0], [0], [1], [0, 0, 1, 1], [], []>} : vector<32x128xbf16>, vector<128x128xbf16>, vector<32x128xf32> -> vector<32x128xf32>
    %14 = arith.truncf %13 : vector<32x128xf32> to vector<32x128xbf16>
    %cst_12 = arith.constant dense<0.000000e+00> : vector<32x128xf32>
    %15 = tpu.matmul %0, %14, %cst_12 {dimension_numbers = #tpu.dot_dimension_numbers<[1], [0], [0], [1], [0, 0, 1, 1], [], []>} : vector<32x32xbf16>, vector<32x128xbf16>, vector<32x128xf32> -> vector<32x128xf32>
    %c0_13 = arith.constant 0 : index
    %c0_14 = arith.constant 0 : index
    %16 = vector.load %arg5[%c0_13, %c0_14] : memref<1x128xf32, #tpu.memory_space<vmem>>, vector<1x128xf32>
    %17 = vector.broadcast %16 : vector<1x128xf32> to vector<32x128xf32>
    %18 = arith.addf %15, %17 : vector<32x128xf32>
    %cst_15 = arith.constant 0.000000e+00 : f32
    %19 = vector.broadcast %cst_15 : f32 to vector<32x128xf32>
    %20 = arith.maximumf %18, %19 : vector<32x128xf32>
    %21 = arith.truncf %20 : vector<32x128xf32> to vector<32x128xbf16>
    %c0_16 = arith.constant 0 : index
    %c0_17 = arith.constant 0 : index
    %22 = vector.load %arg9[%c0_16, %c0_17] : memref<32x128xf32, #tpu.memory_space<vmem>>, vector<32x128xf32>
    tpu.vector_store %arg9[%c0_16, %c0_17], %20 {strides = array<i32>} : memref<32x128xf32, #tpu.memory_space<vmem>>, vector<32x128xf32>,
    %c0_18 = arith.constant 0 : index
    %c0_19 = arith.constant 0 : index
    %23 = vector.load %arg6[%c0_18, %c0_19] : memref<128x128xbf16, #tpu.memory_space<vmem>>, vector<128x128xbf16>
    %cst_20 = arith.constant dense<0.000000e+00> : vector<32x128xf32>
    %24 = tpu.matmul %21, %23, %cst_20 {dimension_numbers = #tpu.dot_dimension_numbers<[1], [0], [0], [1], [0, 0, 1, 1], [], []>} : vector<32x128xbf16>, vector<128x128xbf16>, vector<32x128xf32> -> vector<32x128xf32>
    %25 = arith.truncf %24 : vector<32x128xf32> to vector<32x128xbf16>
    %cst_21 = arith.constant dense<0.000000e+00> : vector<32x128xf32>
    %26 = tpu.matmul %0, %25, %cst_21 {dimension_numbers = #tpu.dot_dimension_numbers<[1], [0], [0], [1], [0, 0, 1, 1], [], []>} : vector<32x32xbf16>, vector<32x128xbf16>, vector<32x128xf32> -> vector<32x128xf32>
    %c0_22 = arith.constant 0 : index
    %c0_23 = arith.constant 0 : index
    %27 = vector.load %arg7[%c0_22, %c0_23] : memref<1x128xf32, #tpu.memory_space<vmem>>, vector<1x128xf32>
    %28 = vector.broadcast %27 : vector<1x128xf32> to vector<32x128xf32>
    %29 = arith.addf %26, %28 : vector<32x128xf32>
    %30 = tpu.iota {dimensions = array<i32: 1>} : vector<32x128xi32>
    %c4_i32 = arith.constant 4 : i32
    %31 = vector.broadcast %c4_i32 : i32 to vector<32x128xi32>
    %32 = arith.cmpi slt, %30, %31 : vector<32x128xi32>
    %cst_24 = arith.constant -1.000000e+30 : f32
    %33 = vector.broadcast %cst_24 : f32 to vector<32x128xf32>
    %34 = arith.select %32, %29, %33 : vector<32x128xi1>, vector<32x128xf32>
    %cst_25 = arith.constant dense<0xFF800000> : vector<32xf32>
    %35 = vector.multi_reduction <maximumf>, %34, %cst_25 [1] : vector<32x128xf32> to vector<32xf32>
    %36 = vector.shape_cast %35 : vector<32xf32> to vector<32x1xf32>
    %37 = vector.broadcast %36 : vector<32x1xf32> to vector<32x128xf32>
    %38 = arith.subf %34, %37 : vector<32x128xf32>
    %39 = math.exp %38 : vector<32x128xf32>
    %cst_26 = arith.constant 0.000000e+00 : f32
    %40 = vector.broadcast %cst_26 : f32 to vector<32x128xf32>
    %41 = arith.select %32, %39, %40 : vector<32x128xi1>, vector<32x128xf32>
    %cst_27 = arith.constant dense<0.000000e+00> : vector<32xf32>
    %42 = vector.multi_reduction <add>, %41, %cst_27 [1] : vector<32x128xf32> to vector<32xf32>
    %43 = vector.shape_cast %42 : vector<32xf32> to vector<32x1xf32>
    %44 = math.log %43 : vector<32x1xf32>
    %45 = vector.broadcast %44 : vector<32x1xf32> to vector<32x128xf32>
    %46 = arith.subf %38, %45 : vector<32x128xf32>
    %cst_28 = arith.constant 0.000000e+00 : f32
    %47 = vector.broadcast %cst_28 : f32 to vector<32x128xf32>
    %48 = arith.select %32, %46, %47 : vector<32x128xi1>, vector<32x128xf32>
    %c0_29 = arith.constant 0 : index
    %c0_30 = arith.constant 0 : index
    %49 = vector.load %arg8[%c0_29, %c0_30] : memref<32x128xf32, #tpu.memory_space<vmem>>, vector<32x128xf32>
    tpu.vector_store %arg8[%c0_29, %c0_30], %48 {strides = array<i32>} : memref<32x128xf32, #tpu.memory_space<vmem>>, vector<32x128xf32>,
    return
  }
}

</mosaic_0001>

<llo_original>
// kernel: tpu_custom_call.1
$region0: #{tpu_custom_call.1}
  #allocation0 [shape = 'u32[]', space=smem, size = 0x4, offset = 0x4, fixed_abs, tag = 'smem constant byte address 0x4 - core index']
  #allocation1 [shape = 'u32[72,128]{1,0:T(1,128)}', space=vmem, size = 0x9000, scoped, tag = 'internal scratch']
  %s0 = inlined_call_operand.hbm [shape: bf16[32,128], index: 0, kind: input, shape index: {}]
  %s1 = inlined_call_operand.hbm [shape: bf16[32,32], index: 1, kind: input, shape index: {}]
  %s2 = inlined_call_operand.hbm [shape: bf16[128,128], index: 2, kind: input, shape index: {}]
  %s3 = inlined_call_operand.vmem [shape: f32[1,128], index: 3, kind: input, shape index: {}]
  %s4 = inlined_call_operand.hbm [shape: bf16[128,128], index: 4, kind: input, shape index: {}]
  %s5 = inlined_call_operand.vmem [shape: f32[1,128], index: 5, kind: input, shape index: {}]
  %s6 = inlined_call_operand.hbm [shape: bf16[128,128], index: 6, kind: input, shape index: {}]
  %s7 = inlined_call_operand.vmem [shape: f32[1,128], index: 7, kind: input, shape index: {}]
  %s8 = inlined_call_operand.hbm [shape: f32[32,128], index: 8, kind: output, shape index: {0}]
  %s9 = inlined_call_operand.hbm [shape: f32[32,128], index: 9, kind: output, shape index: {1}]
  %10 = xla_tuple %s8, %s9
  %s11 = sld [smem:[#allocation0]]
  $region70: #{tpu_custom_call.1} parent=0
    _
  %s13 = ssub.s32 1, %s11
  %s14 = scalar_select 0, %s13, %s11
  $region1: #{tpu_custom_call.1} parent=0
    #allocation2 [shape = 'u8[8192]{0}', space=vmem, size = 0x2000, scoped, tag = 'input window, operand 0, single buffered']
    #allocation3 [shape = 's32[1]{0}', space=sflag, size = 0x4, scoped, tag = 'scoped memory for tpu_custom_call.1']
    #allocation4 [shape = 's32[1]{0}', space=sflag, size = 0x4, scoped, tag = 'scoped memory for tpu_custom_call.1']
    #allocation5 [shape = 'u8[8192]{0}', space=vmem, size = 0x2000, scoped, tag = 'input window, operand 1, single buffered']
    #allocation6 [shape = 's32[1]{0}', space=sflag, size = 0x4, scoped, tag = 'scoped memory for tpu_custom_call.1']
    #allocation7 [shape = 'u8[32768]{0}', space=vmem, size = 0x8000, scoped, tag = 'input window, operand 2, single buffered']
    #allocation8 [shape = 'u8[32768]{0}', space=vmem, size = 0x8000, scoped, tag = 'input window, operand 4, single buffered']
    #allocation9 [shape = 's32[1]{0}', space=sflag, size = 0x4, scoped, tag = 'scoped memory for tpu_custom_call.1']
    #allocation10 [shape = 'u8[32768]{0}', space=vmem, size = 0x8000, scoped, tag = 'input window, operand 6, single buffered']
    #allocation11 [shape = 'u8[16384]{0}', space=vmem, size = 0x4000, scoped, tag = 'output window, operand 0, single buffered']
    #allocation12 [shape = 'u8[16384]{0}', space=vmem, size = 0x4000, scoped, tag = 'output window, operand 1, single buffered']
    #allocation13 [shape = 's32[1]{0}', space=sflag, size = 0x4, scoped, tag = 'scoped memory for tpu_custom_call.1']
    %15 = vsyncpa [#allocation3], 0
    %16 = vsyncpa [#allocation6], 0
    %17 = vsyncpa [#allocation9], 0
    %18 = vsyncpa [#allocation4], 0
    %19 = vsyncpa [#allocation13], 0
    // Predicated region
    $region2: #{tpu_custom_call.1} parent=1 // pred_check
      _
    $region3: #{tpu_custom_call.1} parent=1 // pred_check_branch
      %21 = sbr.rel (0) target = $region5
    $region4: #{tpu_custom_call.1} parent=1 // pred_region
      %23 = vsyncadd [#allocation3], 0
      %s24 = sshll.u32 %s0, 4
      %s25 = int_to_ptr.hbm [resolvable:$true] %s24
      %s26 = sshll.u32 [#allocation2], 4
      %s27 = int_to_ptr.vmem [resolvable:$true] %s26
      %32 = dma.hbm_to_vmem [thread:$0]  %s25, 256, %s27, [#allocation3], 64, 64, 4
    $region5: #{tpu_custom_call.1} parent=1 // pred_fallthru
      _
    // Predicated region
    $region6: #{tpu_custom_call.1} parent=1 // pred_check
      _
    $region7: #{tpu_custom_call.1} parent=1 // pred_check_branch
      %34 = sbr.rel (0) target = $region9
    $region8: #{tpu_custom_call.1} parent=1 // pred_region
      %36 = vsyncadd [#allocation6], 0
      %s37 = sshll.u32 %s1, 4
      %s38 = int_to_ptr.hbm [resolvable:$true] %s37
      %s39 = sshll.u32 [#allocation5], 4
      %s40 = int_to_ptr.vmem [resolvable:$true] %s39
      %45 = dma.hbm_to_vmem [thread:$0]  %s38, 256, %s40, [#allocation6], 64, 64, 4
    $region9: #{tpu_custom_call.1} parent=1 // pred_fallthru
      _
    // Predicated region
    $region10: #{tpu_custom_call.1} parent=1 // pred_check
      _
    $region11: #{tpu_custom_call.1} parent=1 // pred_check_branch
      %47 = sbr.rel (0) target = $region13
    $region12: #{tpu_custom_call.1} parent=1 // pred_region
      %49 = vsyncadd [#allocation6], 0
      %s50 = sshll.u32 %s2, 4
      %s51 = int_to_ptr.hbm [resolvable:$true] %s50
      %s52 = sshll.u32 [#allocation7], 4
      %s53 = int_to_ptr.vmem [resolvable:$true] %s52
      %58 = dma.hbm_to_vmem [thread:$0]  %s51, 1024, %s53, [#allocation6], 64, 64, 4
    $region13: #{tpu_custom_call.1} parent=1 // pred_fallthru
      _
    // Predicated region
    $region14: #{tpu_custom_call.1} parent=1 // pred_check
      _
    $region15: #{tpu_custom_call.1} parent=1 // pred_check_branch
      %60 = sbr.rel (0) target = $region17
    $region16: #{tpu_custom_call.1} parent=1 // pred_region
      _
    $region17: #{tpu_custom_call.1} parent=1 // pred_fallthru
      _
    // Predicated region
    $region18: #{tpu_custom_call.1} parent=1 // pred_check
      _
    $region19: #{tpu_custom_call.1} parent=1 // pred_check_branch
      %62 = sbr.rel (0) target = $region21
    $region20: #{tpu_custom_call.1} parent=1 // pred_region
      %64 = vsyncadd [#allocation9], 0
      %s65 = sshll.u32 %s4, 4
      %s66 = int_to_ptr.hbm [resolvable:$true] %s65
      %s67 = sshll.u32 [#allocation8], 4
      %s68 = int_to_ptr.vmem [resolvable:$true] %s67
      %73 = dma.hbm_to_vmem [thread:$0]  %s66, 1024, %s68, [#allocation9], 64, 64, 4
    $region21: #{tpu_custom_call.1} parent=1 // pred_fallthru
      _
    // Predicated region
    $region22: #{tpu_custom_call.1} parent=1 // pred_check
      _
    $region23: #{tpu_custom_call.1} parent=1 // pred_check_branch
      %75 = sbr.rel (0) target = $region25
    $region24: #{tpu_custom_call.1} parent=1 // pred_region
      _
    $region25: #{tpu_custom_call.1} parent=1 // pred_fallthru
      _
    // Predicated region
    $region26: #{tpu_custom_call.1} parent=1 // pred_check
      _
    $region27: #{tpu_custom_call.1} parent=1 // pred_check_branch
      %77 = sbr.rel (0) target = $region29
    $region28: #{tpu_custom_call.1} parent=1 // pred_region
      %79 = vsyncadd [#allocation9], 0
      %s80 = sshll.u32 %s6, 4
      %s81 = int_to_ptr.hbm [resolvable:$true] %s80
      %s82 = sshll.u32 [#allocation10], 4
      %s83 = int_to_ptr.vmem [resolvable:$true] %s82
      %88 = dma.hbm_to_vmem [thread:$0]  %s81, 1024, %s83, [#allocation9], 64, 64, 4
    $region29: #{tpu_custom_call.1} parent=1 // pred_fallthru
      _
    // Predicated region
    $region30: #{tpu_custom_call.1} parent=1 // pred_check
      _
    $region31: #{tpu_custom_call.1} parent=1 // pred_check_branch
      %90 = sbr.rel (0) target = $region33
    $region32: #{tpu_custom_call.1} parent=1 // pred_region
      _
    $region33: #{tpu_custom_call.1} parent=1 // pred_fallthru
      _
    // Predicated region
    $region34: #{tpu_custom_call.1} parent=1 // pred_check
      _
    $region35: #{tpu_custom_call.1} parent=1 // pred_check_branch
      %92 = sbr.rel (0) target = $region37
    $region36: #{tpu_custom_call.1} parent=1 // pred_region
      %94 = dma.done [#allocation3], 256
    $region37: #{tpu_custom_call.1} parent=1 // pred_fallthru
      _
    // Predicated region
    $region38: #{tpu_custom_call.1} parent=1 // pred_check
      _
    $region39: #{tpu_custom_call.1} parent=1 // pred_check_branch
      %96 = sbr.rel (0) target = $region41
    $region40: #{tpu_custom_call.1} parent=1 // pred_region
      %98 = dma.done [#allocation6], 256
    $region41: #{tpu_custom_call.1} parent=1 // pred_fallthru
      _
    // Predicated region
    $region42: #{tpu_custom_call.1} parent=1 // pred_check
      _
    $region43: #{tpu_custom_call.1} parent=1 // pred_check_branch
      %100 = sbr.rel (0) target = $region45
    $region44: #{tpu_custom_call.1} parent=1 // pred_region
      %102 = dma.done [#allocation6], 1024
    $region45: #{tpu_custom_call.1} parent=1 // pred_fallthru
      _
    // Predicated region
    $region46: #{tpu_custom_call.1} parent=1 // pred_check
      _
    $region47: #{tpu_custom_call.1} parent=1 // pred_check_branch
      %104 = sbr.rel (0) target = $region49
    $region48: #{tpu_custom_call.1} parent=1 // pred_region
      %106 = dma.done [#allocation9], 1024
    $region49: #{tpu_custom_call.1} parent=1 // pred_fallthru
      _
    // Predicated region
    $region50: #{tpu_custom_call.1} parent=1 // pred_check
      _
    $region51: #{tpu_custom_call.1} parent=1 // pred_check_branch
      %108 = sbr.rel (0) target = $region53
    $region52: #{tpu_custom_call.1} parent=1 // pred_region
      %110 = dma.done [#allocation9], 1024
    $region53: #{tpu_custom_call.1} parent=1 // pred_fallthru
      _
    %v112 = vld [vmem:[#allocation5] sm:$0xf]
    %v113 = vld [vmem:[#allocation5 + $0x4] sm:$0xf]
    %v114 = vld [vmem:[#allocation5 + $0x8] sm:$0xf]
    %v115 = vld [vmem:[#allocation5 + $0xc] sm:$0xf]
    %v116 = vld [vmem:[#allocation2] sm:$0xf]
    %v117 = vld [vmem:[#allocation2 + $0x4] sm:$0xf]
    %v118 = vld [vmem:[#allocation2 + $0x8] sm:$0xf]
    %v119 = vld [vmem:[#allocation2 + $0xc] sm:$0xf]
    %v120 = vld [vmem:[#allocation7] sm:$0xf]
    %v121 = vld [vmem:[#allocation7 + $0x4] sm:$0xf]
    %v122 = vld [vmem:[#allocation7 + $0x8] sm:$0xf]
    %v123 = vld [vmem:[#allocation7 + $0xc] sm:$0xf]
    %v124 = vld [vmem:[#allocation7 + $0x10] sm:$0xf]
    %v125 = vld [vmem:[#allocation7 + $0x14] sm:$0xf]
    %v126 = vld [vmem:[#allocation7 + $0x18] sm:$0xf]
    %v127 = vld [vmem:[#allocation7 + $0x1c] sm:$0xf]
    %v128 = vld [vmem:[#allocation7 + $0x20] sm:$0xf]
    %v129 = vld [vmem:[#allocation7 + $0x24] sm:$0xf]
    %v130 = vld [vmem:[#allocation7 + $0x28] sm:$0xf]
    %v131 = vld [vmem:[#allocation7 + $0x2c] sm:$0xf]
    %v132 = vld [vmem:[#allocation7 + $0x30] sm:$0xf]
    %v133 = vld [vmem:[#allocation7 + $0x34] sm:$0xf]
    %v134 = vld [vmem:[#allocation7 + $0x38] sm:$0xf]
    %v135 = vld [vmem:[#allocation7 + $0x3c] sm:$0xf]
    %v140 = vunpack.c.l.b16 %v116
    %v141 = vunpack.c.l.b16 %v117
    %v142 = vunpack.c.l.b16 %v118
    %v143 = vunpack.c.l.b16 %v119
    %v144 = vpack.c.b16 %v141, %v140
    %v145 = vpack.c.b16 %v143, %v142
    %v164 = vunpack.c.l.b16 %v120
    %v165 = vunpack.c.l.b16 %v121
    %v166 = vunpack.c.l.b16 %v122
    %v167 = vunpack.c.l.b16 %v123
    %v168 = vunpack.c.l.b16 %v124
    %v169 = vunpack.c.l.b16 %v125
    %v170 = vunpack.c.l.b16 %v126
    %v171 = vunpack.c.l.b16 %v127
    %v172 = vunpack.c.l.b16 %v128
    %v173 = vunpack.c.l.b16 %v129
    %v174 = vunpack.c.l.b16 %v130
    %v175 = vunpack.c.l.b16 %v131
    %v176 = vunpack.c.l.b16 %v132
    %v177 = vunpack.c.l.b16 %v133
    %v178 = vunpack.c.l.b16 %v134
    %v179 = vunpack.c.l.b16 %v135
    %v180 = vpack.c.b16 %v165, %v164
    %v181 = vpack.c.b16 %v167, %v166
    %v182 = vpack.c.b16 %v169, %v168
    %v183 = vpack.c.b16 %v171, %v170
    %v184 = vpack.c.b16 %v173, %v172
    %v185 = vpack.c.b16 %v175, %v174
    %v186 = vpack.c.b16 %v177, %v176
    %v187 = vpack.c.b16 %v179, %v178
    %196 = vmatpush.bf16.msra.mxu0 %v187
    %197 = vmatpush.bf16.msra.mxu0 %v186
    %198 = vmatpush.bf16.msra.mxu0 %v185
    %199 = vmatpush.bf16.msra.mxu0 %v184
    %200 = vmatpush.bf16.msra.mxu0 %v183
    %201 = vmatpush.bf16.msra.mxu0 %v182
    %202 = vmatpush.bf16.msra.mxu0 %v181
    %203 = vmatpush.bf16.msra.mxu0 %v180
    %204 = vmatmul.bf16.gmra.mxu0 %v144
    %v205 = vpop.f32.mrf.mxu0
    %v206 = vadd.f32 0.0, %v205
    %v207 = vpop.f32.mrf.mxu0
    %v208 = vadd.f32 0.0, %v207
    %209 = vmatmul.bf16.gmra.mxu0 %v145
    %v210 = vpop.f32.mrf.mxu0
    %v211 = vadd.f32 0.0, %v210
    %v212 = vpop.f32.mrf.mxu0
    %v213 = vadd.f32 0.0, %v212
    %214 = vdwg.mxu0
    %v215 = vpack.c.bf16 %v208, %v206
    %v216 = vpack.c.bf16 %v213, %v211
    %v217 = vld [vmem:[%s3] sm:$0x1]
    %v219 = vperm.slane %v217, 0
    %v225 = vunpack.c.l.b16 %v112
    %v226 = vunpack.c.l.b16 %v113
    %v227 = vunpack.c.l.b16 %v114
    %v228 = vunpack.c.l.b16 %v115
    %v229 = vpack.c.b16 %v226, %v225
    %v230 = vpack.c.b16 %v228, %v227
    %vm231 = vcmask 261120
    %v233 = vsel %vm231, %v229, 0
    %v236 = vsel %vm231, %v230, 0
    %238 = vmatpush.bf16.msra.mxu0 0
    %239 = vmatpush.bf16.msra.mxu0 0
    %240 = vmatpush.bf16.msra.mxu0 0
    %241 = vmatpush.bf16.msra.mxu0 0
    %242 = vmatpush.bf16.msra.mxu0 0
    %243 = vmatpush.bf16.msra.mxu0 0
    %244 = vmatpush.bf16.msra.mxu0 %v216
    %245 = vmatpush.bf16.msra.mxu0 %v215
    %246 = vmatmul.bf16.gmra.mxu0 %v233
    %v247 = vpop.f32.mrf.mxu0
    %v248 = vadd.f32 %v219, %v247
    %v249 = vpop.f32.mrf.mxu0
    %v250 = vadd.f32 %v219, %v249
    %251 = vmatmul.bf16.gmra.mxu0 %v236
    %v252 = vpop.f32.mrf.mxu0
    %v253 = vadd.f32 %v219, %v252
    %v254 = vpop.f32.mrf.mxu0
    %v255 = vadd.f32 %v219, %v254
    %256 = vdwg.mxu0
    %v257 = vmax.f32 %v248, 0.0
    %v258 = vmax.f32 %v250, 0.0
    %v259 = vmax.f32 %v253, 0.0
    %v260 = vmax.f32 %v255, 0.0
    %v261 = vpack.c.bf16 %v258, %v257
    %v262 = vpack.c.bf16 %v260, %v259
    %v263 = vld [vmem:[#allocation8] sm:$0xf]
    %v264 = vld [vmem:[#allocation8 + $0x4] sm:$0xf]
    %v265 = vld [vmem:[#allocation8 + $0x8] sm:$0xf]
    %v266 = vld [vmem:[#allocation8 + $0xc] sm:$0xf]
    %v267 = vld [vmem:[#allocation8 + $0x10] sm:$0xf]
    %v268 = vld [vmem:[#allocation8 + $0x14] sm:$0xf]
    %v269 = vld [vmem:[#allocation8 + $0x18] sm:$0xf]
    %v270 = vld [vmem:[#allocation8 + $0x1c] sm:$0xf]
    %v271 = vld [vmem:[#allocation8 + $0x20] sm:$0xf]
    %v272 = vld [vmem:[#allocation8 + $0x24] sm:$0xf]
    %v273 = vld [vmem:[#allocation8 + $0x28] sm:$0xf]
    %v274 = vld [vmem:[#allocation8 + $0x2c] sm:$0xf]
    %v275 = vld [vmem:[#allocation8 + $0x30] sm:$0xf]
    %v276 = vld [vmem:[#allocation8 + $0x34] sm:$0xf]
    %v277 = vld [vmem:[#allocation8 + $0x38] sm:$0xf]
    %v278 = vld [vmem:[#allocation8 + $0x3c] sm:$0xf]
    %v295 = vunpack.c.l.b16 %v263
    %v296 = vunpack.c.l.b16 %v264
    %v297 = vunpack.c.l.b16 %v265
    %v298 = vunpack.c.l.b16 %v266
    %v299 = vunpack.c.l.b16 %v267
    %v300 = vunpack.c.l.b16 %v268
    %v301 = vunpack.c.l.b16 %v269
    %v302 = vunpack.c.l.b16 %v270
    %v303 = vunpack.c.l.b16 %v271
    %v304 = vunpack.c.l.b16 %v272
    %v305 = vunpack.c.l.b16 %v273
    %v306 = vunpack.c.l.b16 %v274
    %v307 = vunpack.c.l.b16 %v275
    %v308 = vunpack.c.l.b16 %v276
    %v309 = vunpack.c.l.b16 %v277
    %v310 = vunpack.c.l.b16 %v278
    %v311 = vpack.c.b16 %v296, %v295
    %v312 = vpack.c.b16 %v298, %v297
    %v313 = vpack.c.b16 %v300, %v299
    %v314 = vpack.c.b16 %v302, %v301
    %v315 = vpack.c.b16 %v304, %v303
    %v316 = vpack.c.b16 %v306, %v305
    %v317 = vpack.c.b16 %v308, %v307
    %v318 = vpack.c.b16 %v310, %v309
    %327 = vmatpush.bf16.msra.mxu0 %v318
    %328 = vmatpush.bf16.msra.mxu0 %v317
    %329 = vmatpush.bf16.msra.mxu0 %v316
    %330 = vmatpush.bf16.msra.mxu0 %v315
    %331 = vmatpush.bf16.msra.mxu0 %v314
    %332 = vmatpush.bf16.msra.mxu0 %v313
    %333 = vmatpush.bf16.msra.mxu0 %v312
    %334 = vmatpush.bf16.msra.mxu0 %v311
    %335 = vmatmul.bf16.gmra.mxu0 %v261
    %v336 = vpop.f32.mrf.mxu0
    %v337 = vadd.f32 0.0, %v336
    %v338 = vpop.f32.mrf.mxu0
    %v339 = vadd.f32 0.0, %v338
    %340 = vmatmul.bf16.gmra.mxu0 %v262
    %v341 = vpop.f32.mrf.mxu0
    %v342 = vadd.f32 0.0, %v341
    %v343 = vpop.f32.mrf.mxu0
    %v344 = vadd.f32 0.0, %v343
    %345 = vdwg.mxu0
    %v346 = vpack.c.bf16 %v339, %v337
    %v347 = vpack.c.bf16 %v344, %v342
    %v348 = vld [vmem:[%s5] sm:$0x1]
    %v350 = vperm.slane %v348, 0
    %352 = vmatpush.bf16.msra.mxu0 0
    %353 = vmatpush.bf16.msra.mxu0 0
    %354 = vmatpush.bf16.msra.mxu0 0
    %355 = vmatpush.bf16.msra.mxu0 0
    %356 = vmatpush.bf16.msra.mxu0 0
    %357 = vmatpush.bf16.msra.mxu0 0
    %358 = vmatpush.bf16.msra.mxu0 %v347
    %359 = vmatpush.bf16.msra.mxu0 %v346
    %360 = vmatmul.bf16.gmra.mxu0 %v233
    %v361 = vpop.f32.mrf.mxu0
    %v362 = vadd.f32 %v350, %v361
    %v363 = vpop.f32.mrf.mxu0
    %v364 = vadd.f32 %v350, %v363
    %365 = vmatmul.bf16.gmra.mxu0 %v236
    %v366 = vpop.f32.mrf.mxu0
    %v367 = vadd.f32 %v350, %v366
    %v368 = vpop.f32.mrf.mxu0
    %v369 = vadd.f32 %v350, %v368
    %370 = vdwg.mxu0
    %v371 = vmax.f32 %v362, 0.0
    %v372 = vmax.f32 %v364, 0.0
    %v373 = vmax.f32 %v367, 0.0
    %v374 = vmax.f32 %v369, 0.0
    %v375 = vpack.c.bf16 %v372, %v371
    %v376 = vpack.c.bf16 %v374, %v373
    %377 = vst [vmem:[#allocation12] sm:$0xff] %v371
    %378 = vst [vmem:[#allocation12 + $0x8] sm:$0xff] %v372
    %379 = vst [vmem:[#allocation12 + $0x10] sm:$0xff] %v373
    %380 = vst [vmem:[#allocation12 + $0x18] sm:$0xff] %v374
    %v381 = vld [vmem:[#allocation10] sm:$0xf]
    %v382 = vld [vmem:[#allocation10 + $0x4] sm:$0xf]
    %v383 = vld [vmem:[#allocation10 + $0x8] sm:$0xf]
    %v384 = vld [vmem:[#allocation10 + $0xc] sm:$0xf]
    %v385 = vld [vmem:[#allocation10 + $0x10] sm:$0xf]
    %v386 = vld [vmem:[#allocation10 + $0x14] sm:$0xf]
    %v387 = vld [vmem:[#allocation10 + $0x18] sm:$0xf]
    %v388 = vld [vmem:[#allocation10 + $0x1c] sm:$0xf]
    %v389 = vld [vmem:[#allocation10 + $0x20] sm:$0xf]
    %v390 = vld [vmem:[#allocation10 + $0x24] sm:$0xf]
    %v391 = vld [vmem:[#allocation10 + $0x28] sm:$0xf]
    %v392 = vld [vmem:[#allocation10 + $0x2c] sm:$0xf]
    %v393 = vld [vmem:[#allocation10 + $0x30] sm:$0xf]
    %v394 = vld [vmem:[#allocation10 + $0x34] sm:$0xf]
    %v395 = vld [vmem:[#allocation10 + $0x38] sm:$0xf]
    %v396 = vld [vmem:[#allocation10 + $0x3c] sm:$0xf]
    %v413 = vunpack.c.l.b16 %v381
    %v414 = vunpack.c.l.b16 %v382
    %v415 = vunpack.c.l.b16 %v383
    %v416 = vunpack.c.l.b16 %v384
    %v417 = vunpack.c.l.b16 %v385
    %v418 = vunpack.c.l.b16 %v386
    %v419 = vunpack.c.l.b16 %v387
    %v420 = vunpack.c.l.b16 %v388
    %v421 = vunpack.c.l.b16 %v389
    %v422 = vunpack.c.l.b16 %v390
    %v423 = vunpack.c.l.b16 %v391
    %v424 = vunpack.c.l.b16 %v392
    %v425 = vunpack.c.l.b16 %v393
    %v426 = vunpack.c.l.b16 %v394
    %v427 = vunpack.c.l.b16 %v395
    %v428 = vunpack.c.l.b16 %v396
    %v429 = vpack.c.b16 %v414, %v413
    %v430 = vpack.c.b16 %v416, %v415
    %v431 = vpack.c.b16 %v418, %v417
    %v432 = vpack.c.b16 %v420, %v419
    %v433 = vpack.c.b16 %v422, %v421
    %v434 = vpack.c.b16 %v424, %v423
    %v435 = vpack.c.b16 %v426, %v425
    %v436 = vpack.c.b16 %v428, %v427
    %445 = vmatpush.bf16.msra.mxu0 %v436
    %446 = vmatpush.bf16.msra.mxu0 %v435
    %447 = vmatpush.bf16.msra.mxu0 %v434
    %448 = vmatpush.bf16.msra.mxu0 %v433
    %449 = vmatpush.bf16.msra.mxu0 %v432
    %450 = vmatpush.bf16.msra.mxu0 %v431
    %451 = vmatpush.bf16.msra.mxu0 %v430
    %452 = vmatpush.bf16.msra.mxu0 %v429
    %453 = vmatmul.bf16.gmra.mxu0 %v375
    %v454 = vpop.f32.mrf.mxu0
    %v455 = vadd.f32 0.0, %v454
    %v456 = vpop.f32.mrf.mxu0
    %v457 = vadd.f32 0.0, %v456
    %458 = vmatmul.bf16.gmra.mxu0 %v376
    %v459 = vpop.f32.mrf.mxu0
    %v460 = vadd.f32 0.0, %v459
    %v461 = vpop.f32.mrf.mxu0
    %v462 = vadd.f32 0.0, %v461
    %463 = vdwg.mxu0
    %v464 = vpack.c.bf16 %v457, %v455
    %v465 = vpack.c.bf16 %v462, %v460
    %v466 = vld [vmem:[%s7] sm:$0x1]
    %v468 = vperm.slane %v466, 0
    %470 = vmatpush.bf16.msra.mxu0 0
    %471 = vmatpush.bf16.msra.mxu0 0
    %472 = vmatpush.bf16.msra.mxu0 0
    %473 = vmatpush.bf16.msra.mxu0 0
    %474 = vmatpush.bf16.msra.mxu0 0
    %475 = vmatpush.bf16.msra.mxu0 0
    %476 = vmatpush.bf16.msra.mxu0 %v465
    %477 = vmatpush.bf16.msra.mxu0 %v464
    %478 = vmatmul.bf16.gmra.mxu0 %v233
    %v479 = vpop.f32.mrf.mxu0
    %v480 = vadd.f32 %v468, %v479
    %v481 = vpop.f32.mrf.mxu0
    %v482 = vadd.f32 %v468, %v481
    %483 = vmatmul.bf16.gmra.mxu0 %v236
    %v484 = vpop.f32.mrf.mxu0
    %v485 = vadd.f32 %v468, %v484
    %v486 = vpop.f32.mrf.mxu0
    %v487 = vadd.f32 %v468, %v486
    %488 = vdwg.mxu0
    %v489 = vlaneseq
    %v490 = vand.u32 %v489, 127
    %vm491 = vcmp.lt.s32.totalorder %v490, 4
    %v492 = vsel %vm491, %v480, -1e+30
    %v493 = vsel %vm491, %v482, -1e+30
    %v494 = vsel %vm491, %v485, -1e+30
    %v495 = vsel %vm491, %v487, -1e+30
    %496 = vmax.xlane.f32.xlu0 %v492
    %v497 = vpop.xlane.xlu0 %496
    %498 = vmax.xlane.f32.xlu0 %v493
    %v499 = vpop.xlane.xlu0 %498
    %500 = vmax.xlane.f32.xlu0 %v494
    %v501 = vpop.xlane.xlu0 %500
    %502 = vmax.xlane.f32.xlu0 %v495
    %v503 = vpop.xlane.xlu0 %502
    %v504 = vsub.f32 %v492, %v497
    %v505 = vsub.f32 %v493, %v499
    %v506 = vsub.f32 %v494, %v501
    %v507 = vsub.f32 %v495, %v503
    %v508 = vmul.f32 %v504, 1.442695
    %v509 = vpow.pop %v508
    %v510 = vmul.f32 %v505, 1.442695
    %v511 = vpow.pop %v510
    %v512 = vmul.f32 %v506, 1.442695
    %v513 = vpow.pop %v512
    %v514 = vmul.f32 %v507, 1.442695
    %v515 = vpow.pop %v514
    %v516 = vsel %vm491, %v509, 0.0
    %v517 = vsel %vm491, %v511, 0.0
    %v518 = vsel %vm491, %v513, 0.0
    %v519 = vsel %vm491, %v515, 0.0
    %520 = vadd.xlane.f32.xlu0 %v516
    %v521 = vpop.xlane.xlu0 %520
    %522 = vadd.xlane.f32.xlu0 %v517
    %v523 = vpop.xlane.xlu0 %522
    %524 = vadd.xlane.f32.xlu0 %v518
    %v525 = vpop.xlane.xlu0 %524
    %526 = vadd.xlane.f32.xlu0 %v519
    %v527 = vpop.xlane.xlu0 %526
    %v528 = vlog2.pop %v521
    %v529 = vmul.f32 %v528, 0.6931472
    %v530 = vlog2.pop %v523
    %v531 = vmul.f32 %v530, 0.6931472
    %v532 = vlog2.pop %v525
    %v533 = vmul.f32 %v532, 0.6931472
    %v534 = vlog2.pop %v527
    %v535 = vmul.f32 %v534, 0.6931472
    %v536 = vsub.f32 %v504, %v529
    %v537 = vsub.f32 %v505, %v531
    %v538 = vsub.f32 %v506, %v533
    %v539 = vsub.f32 %v507, %v535
    %v540 = vsel %vm491, %v536, 0.0
    %v541 = vsel %vm491, %v537, 0.0
    %v542 = vsel %vm491, %v538, 0.0
    %v543 = vsel %vm491, %v539, 0.0
    %544 = vst [vmem:[#allocation11] sm:$0xff] %v540
    %545 = vst [vmem:[#allocation11 + $0x8] sm:$0xff] %v541
    %546 = vst [vmem:[#allocation11 + $0x10] sm:$0xff] %v542
    %547 = vst [vmem:[#allocation11 + $0x18] sm:$0xff] %v543
    // Predicated region
    $region54: #{tpu_custom_call.1} parent=1 // pred_check
      _
    $region55: #{tpu_custom_call.1} parent=1 // pred_check_branch
      %549 = sbr.rel (0) target = $region57
    $region56: #{tpu_custom_call.1} parent=1 // pred_region
      %551 = vsyncadd [#allocation4], 0
      %s552 = sshll.u32 [#allocation11], 4
      %s553 = int_to_ptr.vmem [resolvable:$true] %s552
      %s554 = sshll.u32 %s8, 4
      %s555 = int_to_ptr.hbm [resolvable:$true] %s554
      %560 = dma.vmem_to_hbm [thread:$0]  %s553, 512, %s555, [#allocation4], 128, 128, 8
    $region57: #{tpu_custom_call.1} parent=1 // pred_fallthru
      _
    // Predicated region
    $region58: #{tpu_custom_call.1} parent=1 // pred_check
      _
    $region59: #{tpu_custom_call.1} parent=1 // pred_check_branch
      %562 = sbr.rel (0) target = $region61
    $region60: #{tpu_custom_call.1} parent=1 // pred_region
      %564 = vsyncadd [#allocation13], 0
      %s565 = sshll.u32 [#allocation12], 4
      %s566 = int_to_ptr.vmem [resolvable:$true] %s565
      %s567 = sshll.u32 %s9, 4
      %s568 = int_to_ptr.hbm [resolvable:$true] %s567
      %573 = dma.vmem_to_hbm [thread:$0]  %s566, 512, %s568, [#allocation13], 128, 128, 8
    $region61: #{tpu_custom_call.1} parent=1 // pred_fallthru
      _
    // Predicated region
    $region62: #{tpu_custom_call.1} parent=1 // pred_check
      _
    $region63: #{tpu_custom_call.1} parent=1 // pred_check_branch
      %575 = sbr.rel (0) target = $region65
    $region64: #{tpu_custom_call.1} parent=1 // pred_region
      %577 = dma.done [#allocation4], 512
    $region65: #{tpu_custom_call.1} parent=1 // pred_fallthru
      _
    // Predicated region
    $region66: #{tpu_custom_call.1} parent=1 // pred_check
      _
    $region67: #{tpu_custom_call.1} parent=1 // pred_check_branch
      %579 = sbr.rel (0) target = $region69
    $region68: #{tpu_custom_call.1} parent=1 // pred_region
      %581 = dma.done [#allocation13], 512
    $region69: #{tpu_custom_call.1} parent=1 // pred_fallthru
      _
    %582 = vsyncpa [#allocation3], 1
    %583 = vsyncpa [#allocation6], 1
    %584 = vsyncpa [#allocation9], 1
    %585 = vsyncpa [#allocation4], 1
    %586 = vsyncpa [#allocation13], 1

</llo_original>
